<compile_context>
chip_gen: v7x
topology: tpu7x:2x2x1
jax: 0.10.0
libtpu: 0.0.40
codegen_flags: <defaults>
</compile_context>

<pallas_src>
import functools

import jax
import jax.numpy as jnp
from jax import lax
from jax.experimental import pallas as pl
from jax.experimental.pallas import tpu as pltpu


def _multibox_loss_x_kernel(obj_conf_ref, conf_ref, loc_ref, gloc_ref,
                            objects_ref, objects_mid_ref, objects_low_ref,
                            labels_ref, out_ref, *,
                            neg_pos_ratio_mid, neg_pos_ratio_low):
    f32 = jnp.float32
    obj_conf = obj_conf_ref[0].astype(f32)        # (2, P)   objectness logits
    conf = conf_ref[0].astype(f32)                # (C, P)   class logits
    loc = loc_ref[0].astype(f32)                  # (4, P)
    gloc = gloc_ref[0].astype(f32)                # (4, P)
    objects = objects_ref[0]                      # (1, P) int32
    objects_mid = objects_mid_ref[0]              # (1, P) int32
    objects_low = objects_low_ref[0]              # (1, P) int32
    labels = labels_ref[0]                        # (1, P) int32

    C, P = conf.shape
    NEG_INF = f32(-1e30)

    # ---------- objectness log-softmax (2 classes), lane-dense over priors ---
    m_o = jnp.max(obj_conf, axis=0, keepdims=True)               # (1, P)
    z_o = obj_conf - m_o
    lse_o = jnp.log(jnp.sum(jnp.exp(z_o), axis=0, keepdims=True))
    logp_o = z_o - lse_o                                         # (2, P)
    obj_bg_loss = -logp_o[0:1, :]                                # (1, P) = -log_softmax[...,0]

    # ---------- hard negative mining (approximation, see TODO above) ---------
    pos_mask = objects > 0                                       # (1, P)
    num_pos = jnp.sum(pos_mask.astype(f32))                      # scalar
    not_pos = jnp.logical_not(pos_mask)
    mid_cand = jnp.logical_and(not_pos, objects_mid > 0)
    low_cand = jnp.logical_and(not_pos,
                               jnp.logical_and(objects_mid <= 0, objects_low > 0))
    mine_loss = jnp.where(pos_mask, NEG_INF, obj_bg_loss)        # (1, P)

    # One shared pairwise "j comes before i" matrix (rows = j, cols = i).
    loss_row = mine_loss                                         # (1, P)  over i
    loss_col = mine_loss.reshape(P, 1)                           # (P, 1)  over j
    j_idx = lax.broadcasted_iota(jnp.int32, (P, P), 0)
    i_idx = lax.broadcasted_iota(jnp.int32, (P, P), 1)
    before = jnp.logical_or(
        loss_col > loss_row,
        jnp.logical_and(loss_col == loss_row, j_idx < i_idx)).astype(f32)  # (P, P)

    # Per-pool descending ranks via a single small MXU matmul:
    # rank_pool[i] = sum_j before[j, i] * pool_mask[j].
    masks = jnp.concatenate(
        [mid_cand.astype(f32), low_cand.astype(f32)], axis=0)    # (2, P)
    ranks = jnp.dot(masks, before, preferred_element_type=f32)   # (2, P)
    rank_mid = ranks[0:1, :]
    rank_low = ranks[1:2, :]

    neg_mid = jnp.logical_and(mid_cand, rank_mid < num_pos * f32(neg_pos_ratio_mid))
    neg_low = jnp.logical_and(low_cand, rank_low < num_pos * f32(neg_pos_ratio_low))
    obj_mask = jnp.logical_or(pos_mask, jnp.logical_or(neg_mid, neg_low))   # (1, P)
    num_sel = jnp.sum(obj_mask.astype(f32))

    # ---------- objectness CE over mined priors (targets = objects) ----------
    o_iota = lax.broadcasted_iota(jnp.int32, (2, P), 0)
    obj_ce = -jnp.sum(jnp.where(o_iota == objects, logp_o, 0.0),
                      axis=0, keepdims=True)                     # (1, P)
    obj_ce_sum = jnp.sum(jnp.where(obj_mask, obj_ce, 0.0))

    # ---------- classification CE over positive priors (targets = labels) ----
    m_c = jnp.max(conf, axis=0, keepdims=True)
    z_c = conf - m_c
    logp_c = z_c - jnp.log(jnp.sum(jnp.exp(z_c), axis=0, keepdims=True))    # (C, P)
    c_iota = lax.broadcasted_iota(jnp.int32, (C, P), 0)
    cls_ce = -jnp.sum(jnp.where(c_iota == labels, logp_c, 0.0),
                      axis=0, keepdims=True)                     # (1, P)
    cls_ce_sum = jnp.sum(jnp.where(pos_mask, cls_ce, 0.0))

    # ---------- smooth L1 over positive priors (sum, beta = 1) ---------------
    d = loc - gloc
    ad = jnp.abs(d)
    sl1 = jnp.where(ad < 1.0, 0.5 * d * d, ad - 0.5)             # (4, P)
    sl1_sum = jnp.sum(sl1 * pos_mask.astype(f32))

    # ---------- lane-dense scalar output row ---------------------------------
    lane = lax.broadcasted_iota(jnp.int32, (1, 128), 1)
    row = (jnp.where(lane == 0, sl1_sum, 0.0)
           + jnp.where(lane == 1, cls_ce_sum, 0.0)
           + jnp.where(lane == 2, obj_ce_sum, 0.0)
           + jnp.where(lane == 3, num_pos, 0.0)
           + jnp.where(lane == 4, num_sel, 0.0))
    out_ref[0] = row.astype(out_ref.dtype)


@functools.partial(jax.jit, static_argnames=("neg_pos_ratio_mid",
                                             "neg_pos_ratio_low"))
def multibox_loss_x(object_conf, confidence, locations, objects, objects_mid,
                    objects_low, labels, gt_locations, *,
                    neg_pos_ratio_mid, neg_pos_ratio_low):
    """Returns (smooth_l1/num_pos, classification/num_pos, obj_loss/num_pos)."""
    B, P, num_classes = confidence.shape

    # Lane-dense relayout: prior axis -> lanes (minor).  No dtype upcast here:
    # bf16 inputs stay bf16 over HBM->VMEM, the kernel upcasts in-register.
    obj_conf_t = jnp.transpose(object_conf, (0, 2, 1))       # (B, 2, P)
    conf_t = jnp.transpose(confidence, (0, 2, 1))            # (B, C, P)
    loc_t = jnp.transpose(locations, (0, 2, 1))              # (B, 4, P)
    gloc_t = jnp.transpose(gt_locations, (0, 2, 1))          # (B, 4, P)
    objects_i = objects.astype(jnp.int32).reshape(B, 1, P)
    objects_mid_i = objects_mid.astype(jnp.int32).reshape(B, 1, P)
    objects_low_i = objects_low.astype(jnp.int32).reshape(B, 1, P)
    labels_i = labels.astype(jnp.int32).reshape(B, 1, P)

    kernel = functools.partial(_multibox_loss_x_kernel,
                               neg_pos_ratio_mid=float(neg_pos_ratio_mid),
                               neg_pos_ratio_low=float(neg_pos_ratio_low))

    partials = pl.pallas_call(
        kernel,
        out_shape=jax.ShapeDtypeStruct((B, 1, 128), jnp.float32),
        grid=(B,),
        in_specs=[
            pl.BlockSpec((1, 2, P), lambda b: (b, 0, 0)),
            pl.BlockSpec((1, num_classes, P), lambda b: (b, 0, 0)),
            pl.BlockSpec((1, 4, P), lambda b: (b, 0, 0)),
            pl.BlockSpec((1, 4, P), lambda b: (b, 0, 0)),
            pl.BlockSpec((1, 1, P), lambda b: (b, 0, 0)),
            pl.BlockSpec((1, 1, P), lambda b: (b, 0, 0)),
            pl.BlockSpec((1, 1, P), lambda b: (b, 0, 0)),
            pl.BlockSpec((1, 1, P), lambda b: (b, 0, 0)),
        ],
        out_specs=pl.BlockSpec((1, 1, 128), lambda b: (b, 0, 0)),
        compiler_params=pltpu.CompilerParams(
            dimension_semantics=("parallel",),
            vmem_limit_bytes=48 * 1024 * 1024),
    )(obj_conf_t, conf_t, loc_t, gloc_t,
      objects_i, objects_mid_i, objects_low_i, labels_i)

    sl1_sum = jnp.sum(partials[:, 0, 0])
    cls_sum = jnp.sum(partials[:, 0, 1])
    obj_sum = jnp.sum(partials[:, 0, 2])
    num_pos = jnp.sum(partials[:, 0, 3])
    num_sel = jnp.sum(partials[:, 0, 4])

    denom = num_pos + jnp.float32(1e-6)
    has_sel = num_sel > 0.0        # torch degenerate branch returns exact zeros
    reg_loss = jnp.where(has_sel, sl1_sum / denom, jnp.float32(0.0))
    cls_loss = jnp.where(has_sel, cls_sum / denom, jnp.float32(0.0))
    obj_loss = jnp.where(has_sel, obj_sum / denom, jnp.float32(0.0))
    return reg_loss, cls_loss, obj_loss


class MultiboxLossX:
    """JAX/Pallas counterpart of the torch MultiboxLossX module."""

    def __init__(self, priors, neg_pos_ratio_mid, neg_pos_ratio_low,
                 center_variance, size_variance, device=None):
        # priors / variances are stored but (as in the torch forward) unused.
        self.priors = priors
        self.neg_pos_ratio_mid = neg_pos_ratio_mid
        self.neg_pos_ratio_low = neg_pos_ratio_low
        self.center_variance = center_variance
        self.size_variance = size_variance

    def __call__(self, object_conf, confidence, locations, objects,
                 objects_mid, objects_low, labels, gt_locations):
        return multibox_loss_x(object_conf, confidence, locations, objects,
                               objects_mid, objects_low, labels, gt_locations,
                               neg_pos_ratio_mid=self.neg_pos_ratio_mid,
                               neg_pos_ratio_low=self.neg_pos_ratio_low)


if __name__ == "__main__":
    key = jax.random.PRNGKey(0)
    B, P, C = 2, 128, 8   # batch, num_priors, num_classes
    ks = jax.random.split(key, 9)

    object_conf = jax.random.normal(ks[0], (B, P, 2), jnp.float32)
    confidence = jax.random.normal(ks[1], (B, P, C), jnp.float32)
    locations = jax.random.normal(ks[2], (B, P, 4), jnp.float32)
    gt_locations = jax.random.normal(ks[3], (B, P, 4), jnp.float32)
    objects = jax.random.bernoulli(ks[4], 0.25, (B, P)).astype(jnp.int32)
    objects_mid = jax.random.bernoulli(ks[5], 0.5, (B, P)).astype(jnp.int32)
    objects_low = jax.random.bernoulli(ks[6], 0.5, (B, P)).astype(jnp.int32)
    labels = jax.random.randint(ks[7], (B, P), 0, C, jnp.int32)
    priors = jax.random.uniform(ks[8], (P, 4), jnp.float32)   # deterministic, unused

    loss_mod = MultiboxLossX(priors,
                             neg_pos_ratio_mid=3.0,
                             neg_pos_ratio_low=3.0,
                             center_variance=0.1,
                             size_variance=0.2,
                             device=None)

    reg_loss, cls_loss, obj_loss = loss_mod(object_conf, confidence, locations,
                                            objects, objects_mid, objects_low,
                                            labels, gt_locations)
    jax.block_until_ready((reg_loss, cls_loss, obj_loss))
    print("KERNEL_OK")
</pallas_src>

<mosaic_0001>
module attributes {stable_mosaic.version = 11 : i64} {
  func.func @_multibox_loss_x_kernel(%arg0: i32, %arg1: memref<1x2x128xf32, #tpu.memory_space<vmem>>, %arg2: memref<1x8x128xf32, #tpu.memory_space<vmem>>, %arg3: memref<1x4x128xf32, #tpu.memory_space<vmem>>, %arg4: memref<1x4x128xf32, #tpu.memory_space<vmem>>, %arg5: memref<1x1x128xi32, #tpu.memory_space<vmem>>, %arg6: memref<1x1x128xi32, #tpu.memory_space<vmem>>, %arg7: memref<1x1x128xi32, #tpu.memory_space<vmem>>, %arg8: memref<1x1x128xi32, #tpu.memory_space<vmem>>, %arg9: memref<1x1x128xf32, #tpu.memory_space<vmem>>) attributes {dimension_semantics = [#tpu.dimension_semantics<parallel>], iteration_bounds = array<i64: 2>, scalar_prefetch = 0 : i64, scratch_operands = 0 : i64, tpu.core_type = #tpu.core_type<tc>, window_params = [{transform_indices = @transform_0, window_bounds = array<i64: 1, 2, 128>}, {transform_indices = @transform_1, window_bounds = array<i64: 1, 8, 128>}, {transform_indices = @transform_2, window_bounds = array<i64: 1, 4, 128>}, {transform_indices = @transform_3, window_bounds = array<i64: 1, 4, 128>}, {transform_indices = @transform_4, window_bounds = array<i64: 1, 1, 128>}, {transform_indices = @transform_5, window_bounds = array<i64: 1, 1, 128>}, {transform_indices = @transform_6, window_bounds = array<i64: 1, 1, 128>}, {transform_indices = @transform_7, window_bounds = array<i64: 1, 1, 128>}, {transform_indices = @transform_8, window_bounds = array<i64: 1, 1, 128>}]} {
    %c0 = arith.constant 0 : index
    %c0_0 = arith.constant 0 : index
    %c0_1 = arith.constant 0 : index
    %0 = vector.load %arg1[%c0, %c0_0, %c0_1] : memref<1x2x128xf32, #tpu.memory_space<vmem>>, vector<1x2x128xf32>
    %1 = vector.shape_cast %0 : vector<1x2x128xf32> to vector<2x128xf32>
    %c0_2 = arith.constant 0 : index
    %c0_3 = arith.constant 0 : index
    %c0_4 = arith.constant 0 : index
    %2 = vector.load %arg2[%c0_2, %c0_3, %c0_4] : memref<1x8x128xf32, #tpu.memory_space<vmem>>, vector<1x8x128xf32>
    %3 = vector.shape_cast %2 : vector<1x8x128xf32> to vector<8x128xf32>
    %c0_5 = arith.constant 0 : index
    %c0_6 = arith.constant 0 : index
    %c0_7 = arith.constant 0 : index
    %4 = vector.load %arg3[%c0_5, %c0_6, %c0_7] : memref<1x4x128xf32, #tpu.memory_space<vmem>>, vector<1x4x128xf32>
    %5 = vector.shape_cast %4 : vector<1x4x128xf32> to vector<4x128xf32>
    %c0_8 = arith.constant 0 : index
    %c0_9 = arith.constant 0 : index
    %c0_10 = arith.constant 0 : index
    %6 = vector.load %arg4[%c0_8, %c0_9, %c0_10] : memref<1x4x128xf32, #tpu.memory_space<vmem>>, vector<1x4x128xf32>
    %7 = vector.shape_cast %6 : vector<1x4x128xf32> to vector<4x128xf32>
    %c0_11 = arith.constant 0 : index
    %c0_12 = arith.constant 0 : index
    %c0_13 = arith.constant 0 : index
    %8 = vector.load %arg5[%c0_11, %c0_12, %c0_13] : memref<1x1x128xi32, #tpu.memory_space<vmem>>, vector<1x1x128xi32>
    %9 = vector.shape_cast %8 : vector<1x1x128xi32> to vector<1x128xi32>
    %c0_14 = arith.constant 0 : index
    %c0_15 = arith.constant 0 : index
    %c0_16 = arith.constant 0 : index
    %10 = vector.load %arg6[%c0_14, %c0_15, %c0_16] : memref<1x1x128xi32, #tpu.memory_space<vmem>>, vector<1x1x128xi32>
    %11 = vector.shape_cast %10 : vector<1x1x128xi32> to vector<1x128xi32>
    %c0_17 = arith.constant 0 : index
    %c0_18 = arith.constant 0 : index
    %c0_19 = arith.constant 0 : index
    %12 = vector.load %arg7[%c0_17, %c0_18, %c0_19] : memref<1x1x128xi32, #tpu.memory_space<vmem>>, vector<1x1x128xi32>
    %13 = vector.shape_cast %12 : vector<1x1x128xi32> to vector<1x128xi32>
    %c0_20 = arith.constant 0 : index
    %c0_21 = arith.constant 0 : index
    %c0_22 = arith.constant 0 : index
    %14 = vector.load %arg8[%c0_20, %c0_21, %c0_22] : memref<1x1x128xi32, #tpu.memory_space<vmem>>, vector<1x1x128xi32>
    %15 = vector.shape_cast %14 : vector<1x1x128xi32> to vector<1x128xi32>
    %cst = arith.constant dense<0xFF800000> : vector<128xf32>
    %16 = vector.multi_reduction <maximumf>, %1, %cst [0] : vector<2x128xf32> to vector<128xf32>
    %17 = vector.shape_cast %16 : vector<128xf32> to vector<1x128xf32>
    %18 = vector.broadcast %17 : vector<1x128xf32> to vector<2x128xf32>
    %19 = arith.subf %1, %18 : vector<2x128xf32>
    %20 = math.exp %19 : vector<2x128xf32>
    %cst_23 = arith.constant dense<0.000000e+00> : vector<128xf32>
    %21 = vector.multi_reduction <add>, %20, %cst_23 [0] : vector<2x128xf32> to vector<128xf32>
    %22 = vector.shape_cast %21 : vector<128xf32> to vector<1x128xf32>
    %23 = math.log %22 : vector<1x128xf32>
    %24 = vector.broadcast %23 : vector<1x128xf32> to vector<2x128xf32>
    %25 = arith.subf %19, %24 : vector<2x128xf32>
    %26 = vector.extract_strided_slice %25 {offsets = [0, 0], sizes = [1, 128], strides = [1, 1]} : vector<2x128xf32> to vector<1x128xf32>
    %cst_24 = arith.constant 0.000000e+00 : f32
    %27 = vector.broadcast %cst_24 : f32 to vector<1x128xf32>
    %28 = arith.subf %27, %26 : vector<1x128xf32>
    %c0_i32 = arith.constant 0 : i32
    %29 = vector.broadcast %c0_i32 : i32 to vector<1x128xi32>
    %30 = arith.cmpi sgt, %9, %29 : vector<1x128xi32>
    %31 = arith.extui %30 : vector<1x128xi1> to vector<1x128xi32>
    %32 = arith.sitofp %31 : vector<1x128xi32> to vector<1x128xf32>
    %33 = vector.shape_cast %32 : vector<1x128xf32> to vector<1x1x128xf32>
    %cst_25 = arith.constant dense<0.000000e+00> : vector<1xf32>
    %34 = vector.multi_reduction <add>, %33, %cst_25 [1, 2] : vector<1x1x128xf32> to vector<1xf32>
    %35 = vector.shape_cast %34 : vector<1xf32> to vector<1x1x1xf32>
    %36 = vector.extract %35[0, 0, 0] : f32 from vector<1x1x1xf32>
    %cst_26 = arith.constant dense<true> : vector<1x128xi1>
    %37 = arith.xori %30, %cst_26 : vector<1x128xi1>
    %c0_i32_27 = arith.constant 0 : i32
    %38 = vector.broadcast %c0_i32_27 : i32 to vector<1x128xi32>
    %39 = arith.cmpi sgt, %11, %38 : vector<1x128xi32>
    %40 = arith.andi %37, %39 : vector<1x128xi1>
    %c0_i32_28 = arith.constant 0 : i32
    %41 = vector.broadcast %c0_i32_28 : i32 to vector<1x128xi32>
    %42 = arith.cmpi sle, %11, %41 : vector<1x128xi32>
    %c0_i32_29 = arith.constant 0 : i32
    %43 = vector.broadcast %c0_i32_29 : i32 to vector<1x128xi32>
    %44 = arith.cmpi sgt, %13, %43 : vector<1x128xi32>
    %45 = arith.andi %42, %44 : vector<1x128xi1>
    %46 = arith.andi %37, %45 : vector<1x128xi1>
    %cst_30 = arith.constant -1.000000e+30 : f32
    %47 = vector.broadcast %cst_30 : f32 to vector<1x128xf32>
    %48 = arith.select %30, %47, %28 : vector<1x128xi1>, vector<1x128xf32>
    %49 = vector.shape_cast %48 : vector<1x128xf32> to vector<128x1xf32>
    %50 = tpu.iota {dimensions = array<i32: 0>} : vector<128x128xi32>
    %51 = tpu.iota {dimensions = array<i32: 1>} : vector<128x128xi32>
    %52 = vector.broadcast %49 : vector<128x1xf32> to vector<128x128xf32>
    %53 = vector.broadcast %48 : vector<1x128xf32> to vector<128x128xf32>
    %54 = arith.cmpf ogt, %52, %53 : vector<128x128xf32>
    %55 = vector.broadcast %49 : vector<128x1xf32> to vector<128x128xf32>
    %56 = vector.broadcast %48 : vector<1x128xf32> to vector<128x128xf32>
    %57 = arith.cmpf oeq, %55, %56 : vector<128x128xf32>
    %58 = arith.cmpi slt, %50, %51 : vector<128x128xi32>
    %59 = arith.andi %57, %58 : vector<128x128xi1>
    %60 = arith.ori %54, %59 : vector<128x128xi1>
    %61 = arith.extui %60 : vector<128x128xi1> to vector<128x128xi32>
    %62 = arith.sitofp %61 : vector<128x128xi32> to vector<128x128xf32>
    %63 = arith.extui %40 : vector<1x128xi1> to vector<1x128xi32>
    %64 = arith.sitofp %63 : vector<1x128xi32> to vector<1x128xf32>
    %65 = arith.extui %46 : vector<1x128xi1> to vector<1x128xi32>
    %66 = arith.sitofp %65 : vector<1x128xi32> to vector<1x128xf32>
    %67 = tpu.concatenate %64, %66 in 0 : vector<1x128xf32>, vector<1x128xf32> -> vector<2x128xf32>
    %cst_31 = arith.constant dense<0.000000e+00> : vector<2x128xf32>
    %68 = tpu.matmul %67, %62, %cst_31 {dimension_numbers = #tpu.dot_dimension_numbers<[1], [0], [0], [1], [0, 0, 1, 1], [], []>} : vector<2x128xf32>, vector<128x128xf32>, vector<2x128xf32> -> vector<2x128xf32>
    %69 = vector.extract_strided_slice %68 {offsets = [0, 0], sizes = [1, 128], strides = [1, 1]} : vector<2x128xf32> to vector<1x128xf32>
    %70 = vector.extract_strided_slice %68 {offsets = [1, 0], sizes = [1, 128], strides = [1, 1]} : vector<2x128xf32> to vector<1x128xf32>
    %cst_32 = arith.constant 3.000000e+00 : f32
    %71 = arith.mulf %36, %cst_32 : f32
    %72 = vector.broadcast %71 : f32 to vector<1x128xf32>
    %73 = arith.cmpf olt, %69, %72 : vector<1x128xf32>
    %74 = arith.andi %40, %73 : vector<1x128xi1>
    %cst_33 = arith.constant 3.000000e+00 : f32
    %75 = arith.mulf %36, %cst_33 : f32
    %76 = vector.broadcast %75 : f32 to vector<1x128xf32>
    %77 = arith.cmpf olt, %70, %76 : vector<1x128xf32>
    %78 = arith.andi %46, %77 : vector<1x128xi1>
    %79 = arith.ori %74, %78 : vector<1x128xi1>
    %80 = arith.ori %30, %79 : vector<1x128xi1>
    %81 = arith.extui %80 : vector<1x128xi1> to vector<1x128xi32>
    %82 = arith.sitofp %81 : vector<1x128xi32> to vector<1x128xf32>
    %83 = vector.shape_cast %82 : vector<1x128xf32> to vector<1x1x128xf32>
    %cst_34 = arith.constant dense<0.000000e+00> : vector<1xf32>
    %84 = vector.multi_reduction <add>, %83, %cst_34 [1, 2] : vector<1x1x128xf32> to vector<1xf32>
    %85 = vector.shape_cast %84 : vector<1xf32> to vector<1x1x1xf32>
    %86 = vector.extract %85[0, 0, 0] : f32 from vector<1x1x1xf32>
    %87 = tpu.iota {dimensions = array<i32: 0>} : vector<2x128xi32>
    %88 = vector.broadcast %9 : vector<1x128xi32> to vector<2x128xi32>
    %89 = arith.cmpi eq, %87, %88 : vector<2x128xi32>
    %cst_35 = arith.constant 0.000000e+00 : f32
    %90 = vector.broadcast %cst_35 : f32 to vector<2x128xf32>
    %91 = arith.select %89, %25, %90 : vector<2x128xi1>, vector<2x128xf32>
    %cst_36 = arith.constant dense<0.000000e+00> : vector<128xf32>
    %92 = vector.multi_reduction <add>, %91, %cst_36 [0] : vector<2x128xf32> to vector<128xf32>
    %93 = vector.shape_cast %92 : vector<128xf32> to vector<1x128xf32>
    %cst_37 = arith.constant 0.000000e+00 : f32
    %94 = vector.broadcast %cst_37 : f32 to vector<1x128xf32>
    %95 = arith.subf %94, %93 : vector<1x128xf32>
    %cst_38 = arith.constant 0.000000e+00 : f32
    %96 = vector.broadcast %cst_38 : f32 to vector<1x128xf32>
    %97 = arith.select %80, %95, %96 : vector<1x128xi1>, vector<1x128xf32>
    %98 = vector.shape_cast %97 : vector<1x128xf32> to vector<1x1x128xf32>
    %cst_39 = arith.constant dense<0.000000e+00> : vector<1xf32>
    %99 = vector.multi_reduction <add>, %98, %cst_39 [1, 2] : vector<1x1x128xf32> to vector<1xf32>
    %100 = vector.shape_cast %99 : vector<1xf32> to vector<1x1x1xf32>
    %101 = vector.extract %100[0, 0, 0] : f32 from vector<1x1x1xf32>
    %cst_40 = arith.constant dense<0xFF800000> : vector<128xf32>
    %102 = vector.multi_reduction <maximumf>, %3, %cst_40 [0] : vector<8x128xf32> to vector<128xf32>
    %103 = vector.shape_cast %102 : vector<128xf32> to vector<1x128xf32>
    %104 = vector.broadcast %103 : vector<1x128xf32> to vector<8x128xf32>
    %105 = arith.subf %3, %104 : vector<8x128xf32>
    %106 = math.exp %105 : vector<8x128xf32>
    %cst_41 = arith.constant dense<0.000000e+00> : vector<128xf32>
    %107 = vector.multi_reduction <add>, %106, %cst_41 [0] : vector<8x128xf32> to vector<128xf32>
    %108 = vector.shape_cast %107 : vector<128xf32> to vector<1x128xf32>
    %109 = math.log %108 : vector<1x128xf32>
    %110 = vector.broadcast %109 : vector<1x128xf32> to vector<8x128xf32>
    %111 = arith.subf %105, %110 : vector<8x128xf32>
    %112 = tpu.iota {dimensions = array<i32: 0>} : vector<8x128xi32>
    %113 = vector.broadcast %15 : vector<1x128xi32> to vector<8x128xi32>
    %114 = arith.cmpi eq, %112, %113 : vector<8x128xi32>
    %cst_42 = arith.constant 0.000000e+00 : f32
    %115 = vector.broadcast %cst_42 : f32 to vector<8x128xf32>
    %116 = arith.select %114, %111, %115 : vector<8x128xi1>, vector<8x128xf32>
    %cst_43 = arith.constant dense<0.000000e+00> : vector<128xf32>
    %117 = vector.multi_reduction <add>, %116, %cst_43 [0] : vector<8x128xf32> to vector<128xf32>
    %118 = vector.shape_cast %117 : vector<128xf32> to vector<1x128xf32>
    %cst_44 = arith.constant 0.000000e+00 : f32
    %119 = vector.broadcast %cst_44 : f32 to vector<1x128xf32>
    %120 = arith.subf %119, %118 : vector<1x128xf32>
    %cst_45 = arith.constant 0.000000e+00 : f32
    %121 = vector.broadcast %cst_45 : f32 to vector<1x128xf32>
    %122 = arith.select %30, %120, %121 : vector<1x128xi1>, vector<1x128xf32>
    %123 = vector.shape_cast %122 : vector<1x128xf32> to vector<1x1x128xf32>
    %cst_46 = arith.constant dense<0.000000e+00> : vector<1xf32>
    %124 = vector.multi_reduction <add>, %123, %cst_46 [1, 2] : vector<1x1x128xf32> to vector<1xf32>
    %125 = vector.shape_cast %124 : vector<1xf32> to vector<1x1x1xf32>
    %126 = vector.extract %125[0, 0, 0] : f32 from vector<1x1x1xf32>
    %127 = arith.subf %5, %7 : vector<4x128xf32>
    %128 = math.absf %127 : vector<4x128xf32>
    %cst_47 = arith.constant 1.000000e+00 : f32
    %129 = vector.broadcast %cst_47 : f32 to vector<4x128xf32>
    %130 = arith.cmpf olt, %128, %129 : vector<4x128xf32>
    %cst_48 = arith.constant 5.000000e-01 : f32
    %131 = vector.broadcast %cst_48 : f32 to vector<4x128xf32>
    %132 = arith.mulf %131, %127 : vector<4x128xf32>
    %133 = arith.mulf %132, %127 : vector<4x128xf32>
    %cst_49 = arith.constant 5.000000e-01 : f32
    %134 = vector.broadcast %cst_49 : f32 to vector<4x128xf32>
    %135 = arith.subf %128, %134 : vector<4x128xf32>
    %136 = arith.select %130, %133, %135 : vector<4x128xi1>, vector<4x128xf32>
    %137 = arith.extui %30 : vector<1x128xi1> to vector<1x128xi32>
    %138 = arith.sitofp %137 : vector<1x128xi32> to vector<1x128xf32>
    %139 = vector.broadcast %138 : vector<1x128xf32> to vector<4x128xf32>
    %140 = arith.mulf %136, %139 : vector<4x128xf32>
    %141 = vector.shape_cast %140 : vector<4x128xf32> to vector<1x4x128xf32>
    %cst_50 = arith.constant dense<0.000000e+00> : vector<1xf32>
    %142 = vector.multi_reduction <add>, %141, %cst_50 [1, 2] : vector<1x4x128xf32> to vector<1xf32>
    %143 = vector.shape_cast %142 : vector<1xf32> to vector<1x1x1xf32>
    %144 = vector.extract %143[0, 0, 0] : f32 from vector<1x1x1xf32>
    %145 = tpu.iota {dimensions = array<i32: 1>} : vector<1x128xi32>
    %c0_i32_51 = arith.constant 0 : i32
    %146 = vector.broadcast %c0_i32_51 : i32 to vector<1x128xi32>
    %147 = arith.cmpi eq, %145, %146 : vector<1x128xi32>
    %cst_52 = arith.constant 0.000000e+00 : f32
    %148 = vector.broadcast %144 : f32 to vector<1x128xf32>
    %149 = vector.broadcast %cst_52 : f32 to vector<1x128xf32>
    %150 = arith.select %147, %148, %149 : vector<1x128xi1>, vector<1x128xf32>
    %c1_i32 = arith.constant 1 : i32
    %151 = vector.broadcast %c1_i32 : i32 to vector<1x128xi32>
    %152 = arith.cmpi eq, %145, %151 : vector<1x128xi32>
    %cst_53 = arith.constant 0.000000e+00 : f32
    %153 = vector.broadcast %126 : f32 to vector<1x128xf32>
    %154 = vector.broadcast %cst_53 : f32 to vector<1x128xf32>
    %155 = arith.select %152, %153, %154 : vector<1x128xi1>, vector<1x128xf32>
    %156 = arith.addf %150, %155 : vector<1x128xf32>
    %c2_i32 = arith.constant 2 : i32
    %157 = vector.broadcast %c2_i32 : i32 to vector<1x128xi32>
    %158 = arith.cmpi eq, %145, %157 : vector<1x128xi32>
    %cst_54 = arith.constant 0.000000e+00 : f32
    %159 = vector.broadcast %101 : f32 to vector<1x128xf32>
    %160 = vector.broadcast %cst_54 : f32 to vector<1x128xf32>
    %161 = arith.select %158, %159, %160 : vector<1x128xi1>, vector<1x128xf32>
    %162 = arith.addf %156, %161 : vector<1x128xf32>
    %c3_i32 = arith.constant 3 : i32
    %163 = vector.broadcast %c3_i32 : i32 to vector<1x128xi32>
    %164 = arith.cmpi eq, %145, %163 : vector<1x128xi32>
    %cst_55 = arith.constant 0.000000e+00 : f32
    %165 = vector.broadcast %36 : f32 to vector<1x128xf32>
    %166 = vector.broadcast %cst_55 : f32 to vector<1x128xf32>
    %167 = arith.select %164, %165, %166 : vector<1x128xi1>, vector<1x128xf32>
    %168 = arith.addf %162, %167 : vector<1x128xf32>
    %c4_i32 = arith.constant 4 : i32
    %169 = vector.broadcast %c4_i32 : i32 to vector<1x128xi32>
    %170 = arith.cmpi eq, %145, %169 : vector<1x128xi32>
    %cst_56 = arith.constant 0.000000e+00 : f32
    %171 = vector.broadcast %86 : f32 to vector<1x128xf32>
    %172 = vector.broadcast %cst_56 : f32 to vector<1x128xf32>
    %173 = arith.select %170, %171, %172 : vector<1x128xi1>, vector<1x128xf32>
    %174 = arith.addf %168, %173 : vector<1x128xf32>
    %c0_57 = arith.constant 0 : index
    %c0_58 = arith.constant 0 : index
    %c0_59 = arith.constant 0 : index
    %175 = vector.load %arg9[%c0_57, %c0_58, %c0_59] : memref<1x1x128xf32, #tpu.memory_space<vmem>>, vector<1x1x128xf32>
    %176 = vector.shape_cast %175 : vector<1x1x128xf32> to vector<1x128xf32>
    %177 = vector.shape_cast %174 : vector<1x128xf32> to vector<1x1x128xf32>
    tpu.vector_store %arg9[%c0_57, %c0_58, %c0_59], %177 {strides = array<i32>} : memref<1x1x128xf32, #tpu.memory_space<vmem>>, vector<1x1x128xf32>,
    return
  }
  func.func @transform_0(%arg0: i32) -> (i32, i32, i32) {
    %c0_i32 = arith.constant 0 : i32
    %c0_i32_0 = arith.constant 0 : i32
    %c0_i32_1 = arith.constant 0 : i32
    return %arg0, %c0_i32, %c0_i32_0 : i32, i32, i32
  }
  func.func @transform_1(%arg0: i32) -> (i32, i32, i32) {
    %c0_i32 = arith.constant 0 : i32
    %c0_i32_0 = arith.constant 0 : i32
    %c0_i32_1 = arith.constant 0 : i32
    return %arg0, %c0_i32, %c0_i32_0 : i32, i32, i32
  }
  func.func @transform_2(%arg0: i32) -> (i32, i32, i32) {
    %c0_i32 = arith.constant 0 : i32
    %c0_i32_0 = arith.constant 0 : i32
    %c0_i32_1 = arith.constant 0 : i32
    return %arg0, %c0_i32, %c0_i32_0 : i32, i32, i32
  }
  func.func @transform_3(%arg0: i32) -> (i32, i32, i32) {
    %c0_i32 = arith.constant 0 : i32
    %c0_i32_0 = arith.constant 0 : i32
    %c0_i32_1 = arith.constant 0 : i32
    return %arg0, %c0_i32, %c0_i32_0 : i32, i32, i32
  }
  func.func @transform_4(%arg0: i32) -> (i32, i32, i32) {
    %c0_i32 = arith.constant 0 : i32
    %c0_i32_0 = arith.constant 0 : i32
    %c0_i32_1 = arith.constant 0 : i32
    return %arg0, %c0_i32, %c0_i32_0 : i32, i32, i32
  }
  func.func @transform_5(%arg0: i32) -> (i32, i32, i32) {
    %c0_i32 = arith.constant 0 : i32
    %c0_i32_0 = arith.constant 0 : i32
    %c0_i32_1 = arith.constant 0 : i32
    return %arg0, %c0_i32, %c0_i32_0 : i32, i32, i32
  }
  func.func @transform_6(%arg0: i32) -> (i32, i32, i32) {
    %c0_i32 = arith.constant 0 : i32
    %c0_i32_0 = arith.constant 0 : i32
    %c0_i32_1 = arith.constant 0 : i32
    return %arg0, %c0_i32, %c0_i32_0 : i32, i32, i32
  }
  func.func @transform_7(%arg0: i32) -> (i32, i32, i32) {
    %c0_i32 = arith.constant 0 : i32
    %c0_i32_0 = arith.constant 0 : i32
    %c0_i32_1 = arith.constant 0 : i32
    return %arg0, %c0_i32, %c0_i32_0 : i32, i32, i32
  }
  func.func @transform_8(%arg0: i32) -> (i32, i32, i32) {
    %c0_i32 = arith.constant 0 : i32
    %c0_i32_0 = arith.constant 0 : i32
    %c0_i32_1 = arith.constant 0 : i32
    return %arg0, %c0_i32, %c0_i32_0 : i32, i32, i32
  }
}

</mosaic_0001>

<llo_original>
// kernel: multibox_loss_x.1
$region0: #{multibox_loss_x.1}
  #allocation0 [shape = 'u32[]', space=smem, size = 0x4, offset = 0x4, fixed_abs, tag = 'smem constant byte address 0x4 - core index']
  #allocation1 [shape = 'u32[144,128]{1,0:T(1,128)}', space=vmem, size = 0x12000, scoped, tag = 'internal scratch']
  %s0 = inlined_call_operand.hbm [shape: f32[2,2,128], index: 0, kind: input, shape index: {}]
  %s1 = inlined_call_operand.vmem [shape: f32[2,8,128], index: 1, kind: input, shape index: {}]
  %s2 = inlined_call_operand.vmem [shape: f32[2,4,128], index: 2, kind: input, shape index: {}]
  %s3 = inlined_call_operand.vmem [shape: f32[2,4,128], index: 3, kind: input, shape index: {}]
  %s4 = inlined_call_operand.vmem [shape: s32[2,1,128], index: 4, kind: input, shape index: {}]
  %s5 = inlined_call_operand.vmem [shape: s32[2,1,128], index: 5, kind: input, shape index: {}]
  %s6 = inlined_call_operand.vmem [shape: s32[2,1,128], index: 6, kind: input, shape index: {}]
  %s7 = inlined_call_operand.vmem [shape: s32[2,1,128], index: 7, kind: input, shape index: {}]
  %s8 = inlined_call_operand.vmem [shape: f32[2,1,128], index: 8, kind: output, shape index: {}]
  %s9 = sld [smem:[#allocation0]]
  $region69: #{multibox_loss_x.1} parent=0
    _
  %s11 = ssub.s32 1, %s9
  %s12 = scalar_select 0, %s11, %s9
  $region1: #{multibox_loss_x.1} parent=0
    #allocation2 [shape = 'u8[2048]{0}', space=vmem, size = 0x800, scoped, tag = 'input window, operand 0']
    #allocation3 [shape = 's32[2]{0}', space=sflag, size = 0x8, scoped, tag = 'scoped memory for multibox_loss_x.1']
    %13 = vsyncpa [#allocation3], 0
    %s14 = scalar_lea.sflag [#allocation3], 1
    %15 = vsyncpa %s14, 0
    loop: start=0, step=1, limit=4
    $region2: #{multibox_loss_x.1} parent=1 // loop_pre_header
      _
    $region3: #{multibox_loss_x.1} parent=1 // loop_header
      %s17 = sphi 0, %s21
      %p18 = scmp.ge.s32.totalorder %s17, 4
      %s27 = sphi 0, %s29
      %s30 = sphi 0, %s27
      %s31 = sphi 0, %s30
      %s47 = sphi 0, %s31
      %s53 = sphi 0, %s55
      %s56 = sphi 0, %s53
      %s57 = sphi 0, %s56
      %s73 = sphi 0, %s57
      %s79 = sphi 0, %s81
      %s82 = sphi 0, %s79
      %s83 = sphi 0, %s82
      %s99 = sphi 0, %s83
      %s105 = sphi 0, %s107
      %s108 = sphi 0, %s105
      %s109 = sphi 0, %s108
      %s125 = sphi 0, %s109
      %s131 = sphi 0, %s133
      %s134 = sphi 0, %s131
      %s135 = sphi 0, %s134
      %s151 = sphi 0, %s135
      %s157 = sphi 0, %s159
      %s160 = sphi 0, %s157
      %s161 = sphi 0, %s160
      %s177 = sphi 0, %s161
      %s183 = sphi 0, %s185
      %s186 = sphi 0, %s183
      %s187 = sphi 0, %s186
      %s203 = sphi 0, %s187
      %s209 = sphi 0, %s211
      %s212 = sphi 0, %s209
      %s213 = sphi 0, %s212
      %s229 = sphi 0, %s213
      %s235 = sphi 0, %s237
      %s238 = sphi 0, %s235
      %s239 = sphi 0, %s238
      %s255 = sphi 0, %s239
    $region4: #{multibox_loss_x.1} parent=1 // loop_header_branch
      %20 = sbr.rel (%p18) target = $region8
    $region5: #{multibox_loss_x.1} parent=1 // loop_body
      %s22 = ssub.s32 %s17, 1
      %s23 = ssub.s32 %s17, 2
      %s24 = sadd.s32 %s17, 1
      %s25 = ssub.s32 %s17, %s24
      %p26 = scmp.eq.s32.totalorder %s25, 0
      %s28 = sadd.s32 %s27, 1
      %s29 = scalar_select %p26, %s27, %s28
      %p32 = pneg %p26
      %p33 = scmp.eq.s32.totalorder %s17, 1
      %p34 = por %p32, %p33
      %p35 = scmp.ne.s32.totalorder %s27, %s30
      %p36 = scmp.eq.s32.totalorder %s17, 0
      %p37 = por %p35, %p36
      %p38 = scmp.ne.s32.totalorder %s27, %s30
      %p39 = scmp.eq.s32.totalorder %s22, 1
      %p40 = por %p38, %p39
      %p41 = scmp.ne.s32.totalorder %s30, %s31
      %p42 = scmp.eq.s32.totalorder %s22, 0
      %p43 = por %p41, %p42
      %p44 = scmp.ne.s32.totalorder %s30, %s31
      %p45 = scmp.eq.s32.totalorder %s23, 1
      %p46 = por %p44, %p45
      %p48 = scmp.ne.s32.totalorder %s31, %s47
      %p49 = scmp.eq.s32.totalorder %s23, 0
      %p50 = por %p48, %p49
      %s51 = ssub.s32 %s17, %s24
      %p52 = scmp.eq.s32.totalorder %s51, 0
      %s54 = sadd.s32 %s53, 1
      %s55 = scalar_select %p52, %s53, %s54
      %p58 = pneg %p52
      %p59 = scmp.eq.s32.totalorder %s17, 1
      %p60 = por %p58, %p59
      %p61 = scmp.ne.s32.totalorder %s53, %s56
      %p62 = scmp.eq.s32.totalorder %s17, 0
      %p63 = por %p61, %p62
      %p64 = scmp.ne.s32.totalorder %s53, %s56
      %p65 = scmp.eq.s32.totalorder %s22, 1
      %p66 = por %p64, %p65
      %p67 = scmp.ne.s32.totalorder %s56, %s57
      %p68 = scmp.eq.s32.totalorder %s22, 0
      %p69 = por %p67, %p68
      %p70 = scmp.ne.s32.totalorder %s56, %s57
      %p71 = scmp.eq.s32.totalorder %s23, 1
      %p72 = por %p70, %p71
      %p74 = scmp.ne.s32.totalorder %s57, %s73
      %p75 = scmp.eq.s32.totalorder %s23, 0
      %p76 = por %p74, %p75
      %s77 = ssub.s32 %s17, %s24
      %p78 = scmp.eq.s32.totalorder %s77, 0
      %s80 = sadd.s32 %s79, 1
      %s81 = scalar_select %p78, %s79, %s80
      %p84 = pneg %p78
      %p85 = scmp.eq.s32.totalorder %s17, 1
      %p86 = por %p84, %p85
      %p87 = scmp.ne.s32.totalorder %s79, %s82
      %p88 = scmp.eq.s32.totalorder %s17, 0
      %p89 = por %p87, %p88
      %p90 = scmp.ne.s32.totalorder %s79, %s82
      %p91 = scmp.eq.s32.totalorder %s22, 1
      %p92 = por %p90, %p91
      %p93 = scmp.ne.s32.totalorder %s82, %s83
      %p94 = scmp.eq.s32.totalorder %s22, 0
      %p95 = por %p93, %p94
      %p96 = scmp.ne.s32.totalorder %s82, %s83
      %p97 = scmp.eq.s32.totalorder %s23, 1
      %p98 = por %p96, %p97
      %p100 = scmp.ne.s32.totalorder %s83, %s99
      %p101 = scmp.eq.s32.totalorder %s23, 0
      %p102 = por %p100, %p101
      %s103 = ssub.s32 %s17, %s24
      %p104 = scmp.eq.s32.totalorder %s103, 0
      %s106 = sadd.s32 %s105, 1
      %s107 = scalar_select %p104, %s105, %s106
      %p110 = pneg %p104
      %p111 = scmp.eq.s32.totalorder %s17, 1
      %p112 = por %p110, %p111
      %p113 = scmp.ne.s32.totalorder %s105, %s108
      %p114 = scmp.eq.s32.totalorder %s17, 0
      %p115 = por %p113, %p114
      %p116 = scmp.ne.s32.totalorder %s105, %s108
      %p117 = scmp.eq.s32.totalorder %s22, 1
      %p118 = por %p116, %p117
      %p119 = scmp.ne.s32.totalorder %s108, %s109
      %p120 = scmp.eq.s32.totalorder %s22, 0
      %p121 = por %p119, %p120
      %p122 = scmp.ne.s32.totalorder %s108, %s109
      %p123 = scmp.eq.s32.totalorder %s23, 1
      %p124 = por %p122, %p123
      %p126 = scmp.ne.s32.totalorder %s109, %s125
      %p127 = scmp.eq.s32.totalorder %s23, 0
      %p128 = por %p126, %p127
      %s129 = ssub.s32 %s17, %s24
      %p130 = scmp.eq.s32.totalorder %s129, 0
      %s132 = sadd.s32 %s131, 1
      %s133 = scalar_select %p130, %s131, %s132
      %p136 = pneg %p130
      %p137 = scmp.eq.s32.totalorder %s17, 1
      %p138 = por %p136, %p137
      %p139 = scmp.ne.s32.totalorder %s131, %s134
      %p140 = scmp.eq.s32.totalorder %s17, 0
      %p141 = por %p139, %p140
      %p142 = scmp.ne.s32.totalorder %s131, %s134
      %p143 = scmp.eq.s32.totalorder %s22, 1
      %p144 = por %p142, %p143
      %p145 = scmp.ne.s32.totalorder %s134, %s135
      %p146 = scmp.eq.s32.totalorder %s22, 0
      %p147 = por %p145, %p146
      %p148 = scmp.ne.s32.totalorder %s134, %s135
      %p149 = scmp.eq.s32.totalorder %s23, 1
      %p150 = por %p148, %p149
      %p152 = scmp.ne.s32.totalorder %s135, %s151
      %p153 = scmp.eq.s32.totalorder %s23, 0
      %p154 = por %p152, %p153
      %s155 = ssub.s32 %s17, %s24
      %p156 = scmp.eq.s32.totalorder %s155, 0
      %s158 = sadd.s32 %s157, 1
      %s159 = scalar_select %p156, %s157, %s158
      %p162 = pneg %p156
      %p163 = scmp.eq.s32.totalorder %s17, 1
      %p164 = por %p162, %p163
      %p165 = scmp.ne.s32.totalorder %s157, %s160
      %p166 = scmp.eq.s32.totalorder %s17, 0
      %p167 = por %p165, %p166
      %p168 = scmp.ne.s32.totalorder %s157, %s160
      %p169 = scmp.eq.s32.totalorder %s22, 1
      %p170 = por %p168, %p169
      %p171 = scmp.ne.s32.totalorder %s160, %s161
      %p172 = scmp.eq.s32.totalorder %s22, 0
      %p173 = por %p171, %p172
      %p174 = scmp.ne.s32.totalorder %s160, %s161
      %p175 = scmp.eq.s32.totalorder %s23, 1
      %p176 = por %p174, %p175
      %p178 = scmp.ne.s32.totalorder %s161, %s177
      %p179 = scmp.eq.s32.totalorder %s23, 0
      %p180 = por %p178, %p179
      %s181 = ssub.s32 %s17, %s24
      %p182 = scmp.eq.s32.totalorder %s181, 0
      %s184 = sadd.s32 %s183, 1
      %s185 = scalar_select %p182, %s183, %s184
      %p188 = pneg %p182
      %p189 = scmp.eq.s32.totalorder %s17, 1
      %p190 = por %p188, %p189
      %p191 = scmp.ne.s32.totalorder %s183, %s186
      %p192 = scmp.eq.s32.totalorder %s17, 0
      %p193 = por %p191, %p192
      %p194 = scmp.ne.s32.totalorder %s183, %s186
      %p195 = scmp.eq.s32.totalorder %s22, 1
      %p196 = por %p194, %p195
      %p197 = scmp.ne.s32.totalorder %s186, %s187
      %p198 = scmp.eq.s32.totalorder %s22, 0
      %p199 = por %p197, %p198
      %p200 = scmp.ne.s32.totalorder %s186, %s187
      %p201 = scmp.eq.s32.totalorder %s23, 1
      %p202 = por %p200, %p201
      %p204 = scmp.ne.s32.totalorder %s187, %s203
      %p205 = scmp.eq.s32.totalorder %s23, 0
      %p206 = por %p204, %p205
      %s207 = ssub.s32 %s17, %s24
      %p208 = scmp.eq.s32.totalorder %s207, 0
      %s210 = sadd.s32 %s209, 1
      %s211 = scalar_select %p208, %s209, %s210
      %p214 = pneg %p208
      %p215 = scmp.eq.s32.totalorder %s17, 1
      %p216 = por %p214, %p215
      %p217 = scmp.ne.s32.totalorder %s209, %s212
      %p218 = scmp.eq.s32.totalorder %s17, 0
      %p219 = por %p217, %p218
      %p220 = scmp.ne.s32.totalorder %s209, %s212
      %p221 = scmp.eq.s32.totalorder %s22, 1
      %p222 = por %p220, %p221
      %p223 = scmp.ne.s32.totalorder %s212, %s213
      %p224 = scmp.eq.s32.totalorder %s22, 0
      %p225 = por %p223, %p224
      %p226 = scmp.ne.s32.totalorder %s212, %s213
      %p227 = scmp.eq.s32.totalorder %s23, 1
      %p228 = por %p226, %p227
      %p230 = scmp.ne.s32.totalorder %s213, %s229
      %p231 = scmp.eq.s32.totalorder %s23, 0
      %p232 = por %p230, %p231
      %s233 = ssub.s32 %s17, %s24
      %p234 = scmp.eq.s32.totalorder %s233, 0
      %s236 = sadd.s32 %s235, 1
      %s237 = scalar_select %p234, %s235, %s236
      %p240 = pneg %p234
      %p241 = scmp.eq.s32.totalorder %s17, 1
      %p242 = por %p240, %p241
      %p243 = scmp.ne.s32.totalorder %s235, %s238
      %p244 = scmp.eq.s32.totalorder %s17, 0
      %p245 = por %p243, %p244
      %p246 = scmp.ne.s32.totalorder %s235, %s238
      %p247 = scmp.eq.s32.totalorder %s22, 1
      %p248 = por %p246, %p247
      %p249 = scmp.ne.s32.totalorder %s238, %s239
      %p250 = scmp.eq.s32.totalorder %s22, 0
      %p251 = por %p249, %p250
      %p252 = scmp.ne.s32.totalorder %s238, %s239
      %p253 = scmp.eq.s32.totalorder %s23, 1
      %p254 = por %p252, %p253
      %p256 = scmp.ne.s32.totalorder %s239, %s255
      %p257 = scmp.eq.s32.totalorder %s23, 0
      %p258 = por %p256, %p257
      %p259 = scmp.le.s32.totalorder 1, %s17
      %p260 = scmp.lt.s32.totalorder %s17, 3
      %p261 = pnand %p259, %p260
      %p262 = pneg %p261
      // Predicated region
      $region9: #{multibox_loss_x.1} parent=5 // pred_check
        _
      $region10: #{multibox_loss_x.1} parent=5 // pred_check_branch
        %264 = sbr.rel (%p261) target = $region12
      $region11: #{multibox_loss_x.1} parent=5 // pred_region
        %s265 = ssub.s32 %s17, 1
      $region12: #{multibox_loss_x.1} parent=5 // pred_fallthru
        _
      %p266 = scmp.lt.s32.totalorder %s17, 2
      // Predicated region
      $region13: #{multibox_loss_x.1} parent=5 // pred_check
        %p267 = pneg %p266
      $region14: #{multibox_loss_x.1} parent=5 // pred_check_branch
        %269 = sbr.rel (%p267) target = $region16
      $region15: #{multibox_loss_x.1} parent=5 // pred_region
        // Predicated region
        $region17: #{multibox_loss_x.1} parent=15 // pred_check
          %p270 = pneg %p37
        $region18: #{multibox_loss_x.1} parent=15 // pred_check_branch
          %272 = sbr.rel (%p270) target = $region20
        $region19: #{multibox_loss_x.1} parent=15 // pred_region
          %s273 = sand.u32 %s27, 1
          %s274 = scalar_lea.sflag [#allocation3], %s273
          %s275 = sand.u32 %s27, 1
          %s276 = smul.addr %s275, 2
          %s277 = scalar_lea.vmem [#allocation2], %s276
          %s279 = ssub.s32 32, 32
          %280 = vsyncadd %s274, %s279
          %s281 = smul.addr %s17, 32
          %s282 = scalar_lea.hbm %s0, %s281
          %s284 = sshll.u32 %s277, 4
          %s285 = int_to_ptr.vmem [resolvable:$true] %s284
          %287 = dma.hbm_to_vmem [thread:$0]  %s282, 32, %s285, %s274
        $region20: #{multibox_loss_x.1} parent=15 // pred_fallthru
          _
        // Predicated region
        $region21: #{multibox_loss_x.1} parent=15 // pred_check
          %p288 = pneg %p63
        $region22: #{multibox_loss_x.1} parent=15 // pred_check_branch
          %290 = sbr.rel (%p288) target = $region24
        $region23: #{multibox_loss_x.1} parent=15 // pred_region
          %p291 = scmp.lt.s32.totalorder %s17, 1
          %s292 = scalar_select %p291, %s17, 1
          %s293 = smul.addr %s292, 8
          %s294 = scalar_lea.vmem %s1, %s293
        $region24: #{multibox_loss_x.1} parent=15 // pred_fallthru
          _
        // Predicated region
        $region25: #{multibox_loss_x.1} parent=15 // pred_check
          %p295 = pneg %p89
        $region26: #{multibox_loss_x.1} parent=15 // pred_check_branch
          %297 = sbr.rel (%p295) target = $region28
        $region27: #{multibox_loss_x.1} parent=15 // pred_region
          %p298 = scmp.lt.s32.totalorder %s17, 1
          %s299 = scalar_select %p298, %s17, 1
          %s300 = smul.addr %s299, 4
          %s301 = scalar_lea.vmem %s2, %s300
        $region28: #{multibox_loss_x.1} parent=15 // pred_fallthru
          _
        // Predicated region
        $region29: #{multibox_loss_x.1} parent=15 // pred_check
          %p302 = pneg %p115
        $region30: #{multibox_loss_x.1} parent=15 // pred_check_branch
          %304 = sbr.rel (%p302) target = $region32
        $region31: #{multibox_loss_x.1} parent=15 // pred_region
          %p305 = scmp.lt.s32.totalorder %s17, 1
          %s306 = scalar_select %p305, %s17, 1
          %s307 = smul.addr %s306, 4
          %s308 = scalar_lea.vmem %s3, %s307
        $region32: #{multibox_loss_x.1} parent=15 // pred_fallthru
          _
        // Predicated region
        $region33: #{multibox_loss_x.1} parent=15 // pred_check
          %p309 = pneg %p141
        $region34: #{multibox_loss_x.1} parent=15 // pred_check_branch
          %311 = sbr.rel (%p309) target = $region36
        $region35: #{multibox_loss_x.1} parent=15 // pred_region
          %p312 = scmp.lt.s32.totalorder %s17, 1
          %s313 = scalar_select %p312, %s17, 1
          %s314 = scalar_lea.vmem %s4, %s313
        $region36: #{multibox_loss_x.1} parent=15 // pred_fallthru
          _
        // Predicated region
        $region37: #{multibox_loss_x.1} parent=15 // pred_check
          %p315 = pneg %p167
        $region38: #{multibox_loss_x.1} parent=15 // pred_check_branch
          %317 = sbr.rel (%p315) target = $region40
        $region39: #{multibox_loss_x.1} parent=15 // pred_region
          %p318 = scmp.lt.s32.totalorder %s17, 1
          %s319 = scalar_select %p318, %s17, 1
          %s320 = scalar_lea.vmem %s5, %s319
        $region40: #{multibox_loss_x.1} parent=15 // pred_fallthru
          _
        // Predicated region
        $region41: #{multibox_loss_x.1} parent=15 // pred_check
          %p321 = pneg %p193
        $region42: #{multibox_loss_x.1} parent=15 // pred_check_branch
          %323 = sbr.rel (%p321) target = $region44
        $region43: #{multibox_loss_x.1} parent=15 // pred_region
          %p324 = scmp.lt.s32.totalorder %s17, 1
          %s325 = scalar_select %p324, %s17, 1
          %s326 = scalar_lea.vmem %s6, %s325
        $region44: #{multibox_loss_x.1} parent=15 // pred_fallthru
          _
        // Predicated region
        $region45: #{multibox_loss_x.1} parent=15 // pred_check
          %p327 = pneg %p219
        $region46: #{multibox_loss_x.1} parent=15 // pred_check_branch
          %329 = sbr.rel (%p327) target = $region48
        $region47: #{multibox_loss_x.1} parent=15 // pred_region
          %p330 = scmp.lt.s32.totalorder %s17, 1
          %s331 = scalar_select %p330, %s17, 1
          %s332 = scalar_lea.vmem %s7, %s331
        $region48: #{multibox_loss_x.1} parent=15 // pred_fallthru
          _
      $region16: #{multibox_loss_x.1} parent=5 // pred_fallthru
        _
      %p333 = scmp.le.s32.totalorder 1, %s17
      %p334 = scmp.lt.s32.totalorder %s17, 3
      %p335 = pnand %p333, %p334
      %p336 = pneg %p335
      // Predicated region
      $region49: #{multibox_loss_x.1} parent=5 // pred_check
        _
      $region50: #{multibox_loss_x.1} parent=5 // pred_check_branch
        %338 = sbr.rel (%p335) target = $region52
      $region51: #{multibox_loss_x.1} parent=5 // pred_region
        %s339 = ssub.s32 %s17, 1
        %s340 = sand.u32 %s30, 1
        %s341 = scalar_lea.sflag [#allocation3], %s340
        %s342 = sand.u32 %s30, 1
        %s343 = smul.addr %s342, 2
        %s344 = scalar_lea.vmem [#allocation2], %s343
        // Predicated region
        $region53: #{multibox_loss_x.1} parent=51 // pred_check
          %p345 = pneg %p43
        $region54: #{multibox_loss_x.1} parent=51 // pred_check_branch
          %347 = sbr.rel (%p345) target = $region56
        $region55: #{multibox_loss_x.1} parent=51 // pred_region
          %348 = dma.done %s341, 32
        $region56: #{multibox_loss_x.1} parent=51 // pred_fallthru
          _
        %s349 = sand.u32 %s30, 1
        %s350 = scalar_lea.sflag [#allocation3], %s349
        %s351 = sand.u32 %s30, 1
        %s352 = smul.addr %s351, 2
        %s353 = scalar_lea.vmem [#allocation2], %s352
        %p354 = pneg %p43
        %p355 = pneg %p40
        %p356 = scmp.lt.s32.totalorder %s22, 1
        %s357 = scalar_select %p356, %s22, 1
        %s358 = smul.addr %s357, 8
        %s359 = scalar_lea.vmem %s1, %s358
        %p360 = pneg %p69
        %p361 = pneg %p66
        %p362 = scmp.lt.s32.totalorder %s22, 1
        %s363 = scalar_select %p362, %s22, 1
        %s364 = smul.addr %s363, 4
        %s365 = scalar_lea.vmem %s2, %s364
        %p366 = pneg %p95
        %p367 = pneg %p92
        %p368 = scmp.lt.s32.totalorder %s22, 1
        %s369 = scalar_select %p368, %s22, 1
        %s370 = smul.addr %s369, 4
        %s371 = scalar_lea.vmem %s3, %s370
        %p372 = pneg %p121
        %p373 = pneg %p118
        %p374 = scmp.lt.s32.totalorder %s22, 1
        %s375 = scalar_select %p374, %s22, 1
        %s376 = scalar_lea.vmem %s4, %s375
        %p377 = pneg %p147
        %p378 = pneg %p144
        %p379 = scmp.lt.s32.totalorder %s22, 1
        %s380 = scalar_select %p379, %s22, 1
        %s381 = scalar_lea.vmem %s5, %s380
        %p382 = pneg %p173
        %p383 = pneg %p170
        %p384 = scmp.lt.s32.totalorder %s22, 1
        %s385 = scalar_select %p384, %s22, 1
        %s386 = scalar_lea.vmem %s6, %s385
        %p387 = pneg %p199
        %p388 = pneg %p196
        %p389 = scmp.lt.s32.totalorder %s22, 1
        %s390 = scalar_select %p389, %s22, 1
        %s391 = scalar_lea.vmem %s7, %s390
        %p392 = pneg %p225
        %p393 = pneg %p222
        %p394 = pneg %p251
        %p395 = pneg %p248
        %p396 = scmp.lt.s32.totalorder %s22, 1
        %s397 = scalar_select %p396, %s22, 1
        %s398 = scalar_lea.vmem %s8, %s397
        %p399 = scmp.lt.s32.totalorder %s22, 1
        %s400 = scalar_select %p399, %s22, 1
        %s401 = smul.addr %s400, 8
        %s402 = scalar_lea.vmem %s1, %s401
        %p403 = scmp.lt.s32.totalorder %s22, 1
        %s404 = scalar_select %p403, %s22, 1
        %s405 = smul.addr %s404, 4
        %s406 = scalar_lea.vmem %s2, %s405
        %p407 = scmp.lt.s32.totalorder %s22, 1
        %s408 = scalar_select %p407, %s22, 1
        %s409 = smul.addr %s408, 4
        %s410 = scalar_lea.vmem %s3, %s409
        %p411 = scmp.lt.s32.totalorder %s22, 1
        %s412 = scalar_select %p411, %s22, 1
        %s413 = scalar_lea.vmem %s4, %s412
        %p414 = scmp.lt.s32.totalorder %s22, 1
        %s415 = scalar_select %p414, %s22, 1
        %s416 = scalar_lea.vmem %s5, %s415
        %p417 = scmp.lt.s32.totalorder %s22, 1
        %s418 = scalar_select %p417, %s22, 1
        %s419 = scalar_lea.vmem %s6, %s418
        %p420 = scmp.lt.s32.totalorder %s22, 1
        %s421 = scalar_select %p420, %s22, 1
        %s422 = scalar_lea.vmem %s7, %s421
        %p423 = scmp.lt.s32.totalorder %s22, 1
        %s424 = scalar_select %p423, %s22, 1
        %s425 = scalar_lea.vmem %s8, %s424
        %v426 = vld [vmem:[%s344] sm:$0x3]
        %v427 = vld [vmem:[%s402] sm:$0xff]
        %v428 = vld [vmem:[%s406] sm:$0xf]
        %v429 = vld [vmem:[%s410] sm:$0xf]
        %v430 = vld [vmem:[%s413] sm:$0x1]
        %v431 = vld [vmem:[%s416] sm:$0x1]
        %v432 = vld [vmem:[%s419] sm:$0x1]
        %v433 = vld [vmem:[%s422] sm:$0x1]
        %vm434 = vcmask 1041408
        %v435 = vsel %vm434, %v426, -inf
        %v436 = vrot.slane %v435, 4
        %v437 = vmax.f32 %v435, %v436
        %v438 = vrot.slane %v437, 2
        %v439 = vmax.f32 %v437, %v438
        %v440 = vrot.slane %v439, 1
        %v441 = vmax.f32 %v439, %v440
        %v442 = vsub.f32 %v426, %v441
        %v443 = vmul.f32 %v442, 1.442695
        %v444 = vpow.pop %v443
        %v445 = vsel %vm434, %v444, 0.0
        %v446 = vrot.slane %v445, 4
        %v447 = vadd.f32 %v445, %v446
        %v448 = vrot.slane %v447, 2
        %v449 = vadd.f32 %v447, %v448
        %v450 = vrot.slane %v449, 1
        %v451 = vadd.f32 %v449, %v450
        %v452 = vlog2.pop %v451
        %v453 = vmul.f32 %v452, 0.6931472
        %v454 = vsub.f32 %v442, %v453
        %v455 = vsub.f32 0.0, %v454
        %vm456 = vcmp.gt.s32.totalorder %v430, 0
        %v457 = vsel %vm456, 1, 0
        %v458 = vcvt.s32.f32 %v457
        %vm459 = vcmask 1040384
        %v460 = vsel %vm459, %v458, 0.0
        %461 = vadd.xlane.f32.xlu0 %v460
        %v462 = vpop.xlane.xlu0 %461
        %v463 = vrot.slane %v462, 4
        %v464 = vadd.f32 %v462, %v463
        %v465 = vrot.slane %v464, 2
        %v466 = vadd.f32 %v464, %v465
        %v467 = vrot.slane %v466, 1
        %v468 = vadd.f32 %v466, %v467
        %s469 = vtos %v468
        %vm470 = vmxor %vm456, 1
        %vm471 = vcmp.gt.s32.totalorder %v431, 0
        %vm472 = vmand %vm470, %vm471
        %vm473 = vcmp.le.s32.totalorder %v431, 0
        %vm474 = vcmp.gt.s32.totalorder %v432, 0
        %vm475 = vmand %vm473, %vm474
        %vm476 = vmand %vm470, %vm475
        %v477 = vsel %vm456, -1e+30, %v455
        %v478 = vlaneseq
        %v479 = vshrl.u32 %v478, 7
        %v480 = vsub.s32 0, %v479
        %v481 = vrot.slane %v477, %v480
        %483 = vbcast.lane.b32.xlu0 %v481, 256
        %v484 = vpop.permute.xlu0 %483
        %s486 = sor.u32 256, 8
        %487 = vbcast.lane.b32.xlu0 %v481, %s486
        %v488 = vpop.permute.xlu0 %487
        %s490 = sor.u32 256, 16
        %491 = vbcast.lane.b32.xlu0 %v481, %s490
        %v492 = vpop.permute.xlu0 %491
        %s494 = sor.u32 256, 24
        %495 = vbcast.lane.b32.xlu0 %v481, %s494
        %v496 = vpop.permute.xlu0 %495
        %s498 = sor.u32 256, 32
        %499 = vbcast.lane.b32.xlu0 %v481, %s498
        %v500 = vpop.permute.xlu0 %499
        %s502 = sor.u32 256, 40
        %503 = vbcast.lane.b32.xlu0 %v481, %s502
        %v504 = vpop.permute.xlu0 %503
        %s506 = sor.u32 256, 48
        %507 = vbcast.lane.b32.xlu0 %v481, %s506
        %v508 = vpop.permute.xlu0 %507
        %s510 = sor.u32 256, 56
        %511 = vbcast.lane.b32.xlu0 %v481, %s510
        %v512 = vpop.permute.xlu0 %511
        %s514 = sor.u32 256, 64
        %515 = vbcast.lane.b32.xlu0 %v481, %s514
        %v516 = vpop.permute.xlu0 %515
        %s518 = sor.u32 256, 72
        %519 = vbcast.lane.b32.xlu0 %v481, %s518
        %v520 = vpop.permute.xlu0 %519
        %s522 = sor.u32 256, 80
        %523 = vbcast.lane.b32.xlu0 %v481, %s522
        %v524 = vpop.permute.xlu0 %523
        %s526 = sor.u32 256, 88
        %527 = vbcast.lane.b32.xlu0 %v481, %s526
        %v528 = vpop.permute.xlu0 %527
        %s530 = sor.u32 256, 96
        %531 = vbcast.lane.b32.xlu0 %v481, %s530
        %v532 = vpop.permute.xlu0 %531
        %s534 = sor.u32 256, 104
        %535 = vbcast.lane.b32.xlu0 %v481, %s534
        %v536 = vpop.permute.xlu0 %535
        %s538 = sor.u32 256, 112
        %539 = vbcast.lane.b32.xlu0 %v481, %s538
        %v540 = vpop.permute.xlu0 %539
        %s542 = sor.u32 256, 120
        %543 = vbcast.lane.b32.xlu0 %v481, %s542
        %v544 = vpop.permute.xlu0 %543
        %v545 = vlaneseq
        %v546 = vshrl.u32 %v545, 7
        %v547 = vadd.s32 %v546, 8
        %v548 = vadd.s32 %v546, 16
        %v549 = vadd.s32 %v546, 24
        %v550 = vadd.s32 %v546, 32
        %v551 = vadd.s32 %v546, 40
        %v552 = vadd.s32 %v546, 48
        %v553 = vadd.s32 %v546, 56
        %v554 = vadd.s32 %v546, 64
        %v555 = vadd.s32 %v546, 72
        %v556 = vadd.s32 %v546, 80
        %v557 = vadd.s32 %v546, 88
        %v558 = vadd.s32 %v546, 96
        %v559 = vadd.s32 %v546, 104
        %v560 = vadd.s32 %v546, 112
        %v561 = vadd.s32 %v546, 120
        %v562 = vlaneseq
        %v563 = vand.u32 %v562, 127
        %v565 = vlaneseq
        %v566 = vshrl.u32 %v565, 7
        %v567 = vsub.s32 0, %v566
        %v568 = vrot.slane %v477, %v567
        %vm570 = vcmp.gt.f32.partialorder %v484, %v568
        %vm571 = vcmp.gt.f32.partialorder %v488, %v568
        %vm572 = vcmp.gt.f32.partialorder %v492, %v568
        %vm573 = vcmp.gt.f32.partialorder %v496, %v568
        %vm574 = vcmp.gt.f32.partialorder %v500, %v568
        %vm575 = vcmp.gt.f32.partialorder %v504, %v568
        %vm576 = vcmp.gt.f32.partialorder %v508, %v568
        %vm577 = vcmp.gt.f32.partialorder %v512, %v568
        %vm578 = vcmp.gt.f32.partialorder %v516, %v568
        %vm579 = vcmp.gt.f32.partialorder %v520, %v568
        %vm580 = vcmp.gt.f32.partialorder %v524, %v568
        %vm581 = vcmp.gt.f32.partialorder %v528, %v568
        %vm582 = vcmp.gt.f32.partialorder %v532, %v568
        %vm583 = vcmp.gt.f32.partialorder %v536, %v568
        %vm584 = vcmp.gt.f32.partialorder %v540, %v568
        %vm585 = vcmp.gt.f32.partialorder %v544, %v568
        %vm586 = vcmp.eq.f32.partialorder %v484, %v568
        %vm587 = vcmp.eq.f32.partialorder %v488, %v568
        %vm588 = vcmp.eq.f32.partialorder %v492, %v568
        %vm589 = vcmp.eq.f32.partialorder %v496, %v568
        %vm590 = vcmp.eq.f32.partialorder %v500, %v568
        %vm591 = vcmp.eq.f32.partialorder %v504, %v568
        %vm592 = vcmp.eq.f32.partialorder %v508, %v568
        %vm593 = vcmp.eq.f32.partialorder %v512, %v568
        %vm594 = vcmp.eq.f32.partialorder %v516, %v568
        %vm595 = vcmp.eq.f32.partialorder %v520, %v568
        %vm596 = vcmp.eq.f32.partialorder %v524, %v568
        %vm597 = vcmp.eq.f32.partialorder %v528, %v568
        %vm598 = vcmp.eq.f32.partialorder %v532, %v568
        %vm599 = vcmp.eq.f32.partialorder %v536, %v568
        %vm600 = vcmp.eq.f32.partialorder %v540, %v568
        %vm601 = vcmp.eq.f32.partialorder %v544, %v568
        %vm602 = vcmp.lt.s32.totalorder %v546, %v563
        %vm603 = vcmp.lt.s32.totalorder %v547, %v563
        %vm604 = vcmp.lt.s32.totalorder %v548, %v563
        %vm605 = vcmp.lt.s32.totalorder %v549, %v563
        %vm606 = vcmp.lt.s32.totalorder %v550, %v563
        %vm607 = vcmp.lt.s32.totalorder %v551, %v563
        %vm608 = vcmp.lt.s32.totalorder %v552, %v563
        %vm609 = vcmp.lt.s32.totalorder %v553, %v563
        %vm610 = vcmp.lt.s32.totalorder %v554, %v563
        %vm611 = vcmp.lt.s32.totalorder %v555, %v563
        %vm612 = vcmp.lt.s32.totalorder %v556, %v563
        %vm613 = vcmp.lt.s32.totalorder %v557, %v563
        %vm614 = vcmp.lt.s32.totalorder %v558, %v563
        %vm615 = vcmp.lt.s32.totalorder %v559, %v563
        %vm616 = vcmp.lt.s32.totalorder %v560, %v563
        %vm617 = vcmp.lt.s32.totalorder %v561, %v563
        %vm618 = vmand %vm586, %vm602
        %vm619 = vmand %vm587, %vm603
        %vm620 = vmand %vm588, %vm604
        %vm621 = vmand %vm589, %vm605
        %vm622 = vmand %vm590, %vm606
        %vm623 = vmand %vm591, %vm607
        %vm624 = vmand %vm592, %vm608
        %vm625 = vmand %vm593, %vm609
        %vm626 = vmand %vm594, %vm610
        %vm627 = vmand %vm595, %vm611
        %vm628 = vmand %vm596, %vm612
        %vm629 = vmand %vm597, %vm613
        %vm630 = vmand %vm598, %vm614
        %vm631 = vmand %vm599, %vm615
        %vm632 = vmand %vm600, %vm616
        %vm633 = vmand %vm601, %vm617
        %vm634 = vmor %vm570, %vm618
        %vm635 = vmor %vm571, %vm619
        %vm636 = vmor %vm572, %vm620
        %vm637 = vmor %vm573, %vm621
        %vm638 = vmor %vm574, %vm622
        %vm639 = vmor %vm575, %vm623
        %vm640 = vmor %vm576, %vm624
        %vm641 = vmor %vm577, %vm625
        %vm642 = vmor %vm578, %vm626
        %vm643 = vmor %vm579, %vm627
        %vm644 = vmor %vm580, %vm628
        %vm645 = vmor %vm581, %vm629
        %vm646 = vmor %vm582, %vm630
        %vm647 = vmor %vm583, %vm631
        %vm648 = vmor %vm584, %vm632
        %vm649 = vmor %vm585, %vm633
        %v650 = vsel %vm634, 1, 0
        %v651 = vsel %vm635, 1, 0
        %v652 = vsel %vm636, 1, 0
        %v653 = vsel %vm637, 1, 0
        %v654 = vsel %vm638, 1, 0
        %v655 = vsel %vm639, 1, 0
        %v656 = vsel %vm640, 1, 0
        %v657 = vsel %vm641, 1, 0
        %v658 = vsel %vm642, 1, 0
        %v659 = vsel %vm643, 1, 0
        %v660 = vsel %vm644, 1, 0
        %v661 = vsel %vm645, 1, 0
        %v662 = vsel %vm646, 1, 0
        %v663 = vsel %vm647, 1, 0
        %v664 = vsel %vm648, 1, 0
        %v665 = vsel %vm649, 1, 0
        %v666 = vcvt.s32.f32 %v650
        %v667 = vcvt.s32.f32 %v651
        %v668 = vcvt.s32.f32 %v652
        %v669 = vcvt.s32.f32 %v653
        %v670 = vcvt.s32.f32 %v654
        %v671 = vcvt.s32.f32 %v655
        %v672 = vcvt.s32.f32 %v656
        %v673 = vcvt.s32.f32 %v657
        %v674 = vcvt.s32.f32 %v658
        %v675 = vcvt.s32.f32 %v659
        %v676 = vcvt.s32.f32 %v660
        %v677 = vcvt.s32.f32 %v661
        %v678 = vcvt.s32.f32 %v662
        %v679 = vcvt.s32.f32 %v663
        %v680 = vcvt.s32.f32 %v664
        %v681 = vcvt.s32.f32 %v665
        %v682 = vsel %vm472, 1, 0
        %v683 = vcvt.s32.f32 %v682
        %v684 = vsel %vm476, 1, 0
        %v685 = vcvt.s32.f32 %v684
        %v687 = vlaneseq
        %v688 = vshrl.u32 %v687, 7
        %v689 = vsub.s32 0, %v688
        %v690 = vrot.slane %v685, %v689
        %v692 = vsel %vm459, %v683, %v690
        %693 = vmatprep.subr.mxu0 0.0
        %694 = vmatpush1.msra.mxu0 %v666
        %695 = vmatprep.subr.mxu0 0.0
        %696 = vmatpush1.msra.mxu0 %v667
        %697 = vmatprep.subr.mxu0 0.0
        %698 = vmatpush1.msra.mxu0 %v668
        %699 = vmatprep.subr.mxu0 0.0
        %700 = vmatpush1.msra.mxu0 %v669
        %701 = vmatprep.subr.mxu0 0.0
        %702 = vmatpush1.msra.mxu0 %v670
        %703 = vmatprep.subr.mxu0 0.0
        %704 = vmatpush1.msra.mxu0 %v671
        %705 = vmatprep.subr.mxu0 0.0
        %706 = vmatpush1.msra.mxu0 %v672
        %707 = vmatprep.subr.mxu0 0.0
        %708 = vmatpush1.msra.mxu0 %v673
        %709 = vmatprep.subr.mxu0 0.0
        %710 = vmatpush1.msra.mxu0 %v674
        %711 = vmatprep.subr.mxu0 0.0
        %712 = vmatpush1.msra.mxu0 %v675
        %713 = vmatprep.subr.mxu0 0.0
        %714 = vmatpush1.msra.mxu0 %v676
        %715 = vmatprep.subr.mxu0 0.0
        %716 = vmatpush1.msra.mxu0 %v677
        %717 = vmatprep.subr.mxu0 0.0
        %718 = vmatpush1.msra.mxu0 %v678
        %719 = vmatprep.subr.mxu0 0.0
        %720 = vmatpush1.msra.mxu0 %v679
        %721 = vmatprep.subr.mxu0 0.0
        %722 = vmatpush1.msra.mxu0 %v680
        %723 = vmatprep.subr.mxu0 0.0
        %724 = vmatpush1.msra.mxu0 %v681
        %725 = vmatprep.subr.mxu0 0.0
        %726 = vmatpush1.msra.mxu0 0.0
        %727 = vmatprep.subr.mxu0 0.0
        %728 = vmatpush1.msra.mxu0 0.0
        %729 = vmatprep.subr.mxu0 0.0
        %730 = vmatpush1.msra.mxu0 0.0
        %731 = vmatprep.subr.mxu0 0.0
        %732 = vmatpush1.msra.mxu0 0.0
        %733 = vmatprep.subr.mxu0 0.0
        %734 = vmatpush1.msra.mxu0 0.0
        %735 = vmatprep.subr.mxu0 0.0
        %736 = vmatpush1.msra.mxu0 0.0
        %737 = vmatprep.subr.mxu0 0.0
        %738 = vmatpush1.msra.mxu0 0.0
        %739 = vmatprep.subr.mxu0 0.0
        %740 = vmatpush1.msra.mxu0 0.0
        %741 = vmatprep.subr.mxu0 0.0
        %742 = vmatpush1.msra.mxu0 0.0
        %743 = vmatprep.subr.mxu0 0.0
        %744 = vmatpush1.msra.mxu0 0.0
        %745 = vmatprep.subr.mxu0 0.0
        %746 = vmatpush1.msra.mxu0 0.0
        %747 = vmatprep.subr.mxu0 0.0
        %748 = vmatpush1.msra.mxu0 0.0
        %749 = vmatprep.subr.mxu0 0.0
        %750 = vmatpush1.msra.mxu0 0.0
        %751 = vmatprep.subr.mxu0 0.0
        %752 = vmatpush1.msra.mxu0 0.0
        %753 = vmatprep.subr.mxu0 0.0
        %754 = vmatpush1.msra.mxu0 0.0
        %755 = vmatprep.subr.mxu0 0.0
        %756 = vmatpush1.msra.mxu0 0.0
        %757 = vmatprep.mubr.f32.mxu0 0.0
        %758 = vmatmul.mubr.f32.gmra.mrb[0].mxu0 %v692
        %v759 = vpop.f32.mrb[0].mxu0
        %v760 = vadd.f32 0.0, %v759
        %v761 = vpop.f32.mrb[0].mxu0
        %762 = vdwg.mxu0
        %s763 = smul.f32 %s469, 3.0
        %v764 = vstv %s763
        %vm765 = vcmp.lt.f32.partialorder %v760, %v764
        %vm766 = vmand %vm472, %vm765
        %v767 = vsel %vm765, 1, 0
        %v769 = vunpack.c.l.s4 1966171168
        %v770 = vunpack.c.0.s8 %v769
        %v771 = vlaneseq
        %v772 = vshrl.u32 %v771, 7
        %v773 = vsub.s32 %v770, %v772
        %v774 = vrot.slane %v767, %v773
        %v775 = vcombine.high %v774, %v774
        %v777 = vunpack.c.l.s4 1966171168
        %v778 = vunpack.c.0.s8 %v777
        %v779 = vlaneseq
        %v780 = vshrl.u32 %v779, 7
        %v781 = vsub.s32 %v778, %v780
        %v782 = vrot.slane %v775, %v781
        %vm783 = vcmp.ne.s32.totalorder %v782, 0
        %vm784 = vmand %vm476, %vm783
        %vm785 = vmor %vm766, %vm784
        %vm786 = vmor %vm456, %vm785
        %v787 = vsel %vm786, 1, 0
        %v788 = vcvt.s32.f32 %v787
        %v789 = vsel %vm459, %v788, 0.0
        %790 = vadd.xlane.f32.xlu0 %v789
        %v791 = vpop.xlane.xlu0 %790
        %v792 = vrot.slane %v791, 4
        %v793 = vadd.f32 %v791, %v792
        %v794 = vrot.slane %v793, 2
        %v795 = vadd.f32 %v793, %v794
        %v796 = vrot.slane %v795, 1
        %v797 = vadd.f32 %v795, %v796
        %s798 = vtos %v797
        %v799 = vlaneseq
        %v800 = vshrl.u32 %v799, 7
        %v801 = vsub.s32 0, %v800
        %v802 = vrot.slane %v430, %v801
        %vm803 = vcmp.eq.s32.totalorder %v546, %v802
        %v804 = vsel %vm803, %v454, 0.0
        %v805 = vsel %vm434, %v804, 0.0
        %v806 = vrot.slane %v805, 4
        %v807 = vadd.f32 %v805, %v806
        %v808 = vrot.slane %v807, 2
        %v809 = vadd.f32 %v807, %v808
        %v810 = vrot.slane %v809, 1
        %v811 = vadd.f32 %v809, %v810
        %v812 = vsub.f32 0.0, %v811
        %v813 = vsel %vm786, %v812, 0.0
        %v814 = vsel %vm459, %v813, 0.0
        %815 = vadd.xlane.f32.xlu0 %v814
        %v816 = vpop.xlane.xlu0 %815
        %v817 = vrot.slane %v816, 4
        %v818 = vadd.f32 %v816, %v817
        %v819 = vrot.slane %v818, 2
        %v820 = vadd.f32 %v818, %v819
        %v821 = vrot.slane %v820, 1
        %v822 = vadd.f32 %v820, %v821
        %s823 = vtos %v822
        %v824 = vrot.slane %v427, 4
        %v825 = vmax.f32 %v427, %v824
        %v826 = vrot.slane %v825, 2
        %v827 = vmax.f32 %v825, %v826
        %v828 = vrot.slane %v827, 1
        %v829 = vmax.f32 %v827, %v828
        %v830 = vsub.f32 %v427, %v829
        %v831 = vmul.f32 %v830, 1.442695
        %v832 = vpow.pop %v831
        %v833 = vrot.slane %v832, 4
        %v834 = vadd.f32 %v832, %v833
        %v835 = vrot.slane %v834, 2
        %v836 = vadd.f32 %v834, %v835
        %v837 = vrot.slane %v836, 1
        %v838 = vadd.f32 %v836, %v837
        %v839 = vlog2.pop %v838
        %v840 = vmul.f32 %v839, 0.6931472
        %v841 = vsub.f32 %v830, %v840
        %v842 = vlaneseq
        %v843 = vshrl.u32 %v842, 7
        %v844 = vsub.s32 0, %v843
        %v845 = vrot.slane %v433, %v844
        %vm846 = vcmp.eq.s32.totalorder %v546, %v845
        %v847 = vsel %vm846, %v841, 0.0
        %v848 = vrot.slane %v847, 4
        %v849 = vadd.f32 %v847, %v848
        %v850 = vrot.slane %v849, 2
        %v851 = vadd.f32 %v849, %v850
        %v852 = vrot.slane %v851, 1
        %v853 = vadd.f32 %v851, %v852
        %v854 = vsub.f32 0.0, %v853
        %v855 = vsel %vm456, %v854, 0.0
        %v856 = vsel %vm459, %v855, 0.0
        %857 = vadd.xlane.f32.xlu0 %v856
        %v858 = vpop.xlane.xlu0 %857
        %v859 = vrot.slane %v858, 4
        %v860 = vadd.f32 %v858, %v859
        %v861 = vrot.slane %v860, 2
        %v862 = vadd.f32 %v860, %v861
        %v863 = vrot.slane %v862, 1
        %v864 = vadd.f32 %v862, %v863
        %s865 = vtos %v864
        %v866 = vsub.f32 %v428, %v429
        %v867 = vand.u32 2147483647, %v866
        %vm868 = vcmp.lt.f32.partialorder %v867, 1.0
        %v869 = vmul.f32 %v866, 0.5
        %v870 = vmul.f32 %v869, %v866
        %v871 = vsub.f32 %v867, 0.5
        %v872 = vsel %vm868, %v870, %v871
        %v874 = vlaneseq
        %v875 = vshrl.u32 %v874, 7
        %v876 = vsub.s32 0, %v875
        %v877 = vrot.slane %v458, %v876
        %v879 = vmul.f32 %v872, %v877
        %vm880 = vcmask 1043456
        %v881 = vsel %vm880, %v879, 0.0
        %882 = vadd.xlane.f32.xlu0 %v881
        %v883 = vpop.xlane.xlu0 %882
        %v884 = vrot.slane %v883, 4
        %v885 = vadd.f32 %v883, %v884
        %v886 = vrot.slane %v885, 2
        %v887 = vadd.f32 %v885, %v886
        %v888 = vrot.slane %v887, 1
        %v889 = vadd.f32 %v887, %v888
        %s890 = vtos %v889
        %vm891 = vcmp.eq.s32.totalorder %v563, 0
        %v892 = vstv %s890
        %v893 = vsel %vm891, %v892, 0.0
        %vm894 = vcmp.eq.s32.totalorder %v563, 1
        %v895 = vstv %s865
        %v896 = vsel %vm894, %v895, 0.0
        %v897 = vadd.f32 %v893, %v896
        %vm898 = vcmp.eq.s32.totalorder %v563, 2
        %v899 = vstv %s823
        %v900 = vsel %vm898, %v899, 0.0
        %v901 = vadd.f32 %v897, %v900
        %vm902 = vcmp.eq.s32.totalorder %v563, 3
        %v903 = vstv %s469
        %v904 = vsel %vm902, %v903, 0.0
        %v905 = vadd.f32 %v901, %v904
        %vm906 = vcmp.eq.s32.totalorder %v563, 4
        %v907 = vstv %s798
        %v908 = vsel %vm906, %v907, 0.0
        %v909 = vadd.f32 %v905, %v908
        %910 = vst [vmem:[%s425] sm:$0x1] %v909
        %p911 = scmp.lt.s32.totalorder %s22, 1
        %s912 = scalar_select %p911, %s22, 1
        %s913 = scalar_lea.vmem %s8, %s912
        // Predicated region
        $region57: #{multibox_loss_x.1} parent=51 // pred_check
          %p914 = pneg %p248
        $region58: #{multibox_loss_x.1} parent=51 // pred_check_branch
          %916 = sbr.rel (%p914) target = $region60
        $region59: #{multibox_loss_x.1} parent=51 // pred_region
          _
        $region60: #{multibox_loss_x.1} parent=51 // pred_fallthru
          _
      $region52: #{multibox_loss_x.1} parent=5 // pred_fallthru
        _
      %p917 = scmp.le.s32.totalorder 2, %s17
      // Predicated region
      $region61: #{multibox_loss_x.1} parent=5 // pred_check
        %p918 = pneg %p917
      $region62: #{multibox_loss_x.1} parent=5 // pred_check_branch
        %920 = sbr.rel (%p918) target = $region64
      $region63: #{multibox_loss_x.1} parent=5 // pred_region
        %s921 = ssub.s32 %s17, 2
        // Predicated region
        $region65: #{multibox_loss_x.1} parent=63 // pred_check
          %p922 = pneg %p254
        $region66: #{multibox_loss_x.1} parent=63 // pred_check_branch
          %924 = sbr.rel (%p922) target = $region68
        $region67: #{multibox_loss_x.1} parent=63 // pred_region
          %p925 = scmp.lt.s32.totalorder %s23, 1
          %s926 = scalar_select %p925, %s23, 1
          %s927 = scalar_lea.vmem %s8, %s926
        $region68: #{multibox_loss_x.1} parent=63 // pred_fallthru
          _
      $region64: #{multibox_loss_x.1} parent=5 // pred_fallthru
        _
    $region6: #{multibox_loss_x.1} parent=1 // loop_footer
      %s21 = sadd.s32 1, %s17
    $region7: #{multibox_loss_x.1} parent=1 // loop_footer_branch
      %16 = sbr.rel target = $region3
    $region8: #{multibox_loss_x.1} parent=1 // loop_exit
      _
    %928 = vsyncpa [#allocation3], 1
    %s929 = scalar_lea.sflag [#allocation3], 1
    %930 = vsyncpa %s929, 1

</llo_original>
